<compile_context>
chip_gen: v7x
topology: tpu7x:2x2x1
jax: 0.10.0
libtpu: 0.0.40
codegen_flags: <defaults>
</compile_context>

<pallas_src>
import functools

import jax
import jax.numpy as jnp
from jax.experimental import pallas as pl
from jax.experimental.pallas import tpu as pltpu


def mm_attn_kernel(w_ref, x_ref, o_ref, *, P, C, nb):
    # Packed weights: rows [0, 3P) hold [W_g; W_theta; W_phi], rows [3P, 3P+C) hold W_z.
    # Column C holds the per-row biases (zeros for W_g rows).
    w_proj = w_ref[0:3 * P, 0:C]                 # (3P, C)   K = C (aligned)
    b_proj = w_ref[0:3 * P, C:C + 1]             # (3P, 1)
    w_z = w_ref[3 * P:3 * P + C, 0:P]            # (C, P)    K = P (aligned)
    b_z = w_ref[3 * P:3 * P + C, C:C + 1]        # (C, 1)

    for n in range(nb):                          # unrolled; per-batch tiles are (C, L)
        x_n = x_ref[n]                           # (C, L) native layout, lane-dense

        # One fused MXU matmul for g / theta / phi; biases ride the idle VPU.
        proj = jnp.dot(w_proj, x_n, preferred_element_type=jnp.float32) + b_proj
        g = proj[0 * P:1 * P, :]                 # (P, L)
        theta = proj[1 * P:2 * P, :]             # (P, L)
        phi = proj[2 * P:3 * P, :]               # (P, L)

        # Channel-channel attention: f[p, q] = sum_l theta[p, l] * phi[q, l]
        f = jax.lax.dot_general(theta, phi, (((1,), (1,)), ((), ())),
                                preferred_element_type=jnp.float32)   # (P, P)
        f = f - jnp.max(f, axis=-1, keepdims=True)
        e = jnp.exp(f)
        inv = pl.reciprocal(jnp.sum(e, axis=-1, keepdims=True), approx=False)
        att = e * inv                            # softmax over last axis

        y = jnp.dot(att, g, preferred_element_type=jnp.float32)       # (P, L)
        z = jnp.dot(w_z, y, preferred_element_type=jnp.float32) + b_z  # (C, L)

        # Direct lane-dense store (unmasked vst), residual fused in.
        o_ref[n] = (z + x_n).astype(o_ref.dtype)


def pack_weights(wg, wth, bth, wph, bph, wz, bz):
    """Build the single packed weight block ONCE at model-init time."""
    P, C = wg.shape
    rows = 3 * P + C
    cols = C + 1                                  # last column = biases
    w_all = jnp.zeros((rows, cols), jnp.float32)
    w_all = w_all.at[0 * P:1 * P, :C].set(wg)     # W_g (no bias)
    w_all = w_all.at[1 * P:2 * P, :C].set(wth)
    w_all = w_all.at[1 * P:2 * P, C].set(bth)
    w_all = w_all.at[2 * P:3 * P, :C].set(wph)
    w_all = w_all.at[2 * P:3 * P, C].set(bph)
    w_all = w_all.at[3 * P:, :P].set(wz)
    w_all = w_all.at[3 * P:, C].set(bz)
    return w_all


def multimodal_attention(x, w_all, *, planes, batch_blocks=1):
    N, C, L = x.shape
    P = planes
    assert N % batch_blocks == 0
    nb = N // batch_blocks                         # batches per grid step
    assert C % 8 == 0, "C must be sublane-aligned (multiple of 8)"
    assert L % 128 == 0, "L must be lane-aligned (multiple of 128)"
    rows, cols = w_all.shape
    assert rows == 3 * P + C and cols == C + 1

    kernel = functools.partial(mm_attn_kernel, P=P, C=C, nb=nb)

    return pl.pallas_call(
        kernel,
        out_shape=jax.ShapeDtypeStruct((N, C, L), x.dtype),
        grid_spec=pltpu.PrefetchScalarGridSpec(
            num_scalar_prefetch=0,
            grid=(batch_blocks,),
            in_specs=[
                pl.BlockSpec((rows, cols), lambda b: (0, 0)),     # packed weights, 1 DMA
                pl.BlockSpec((nb, C, L), lambda b: (b, 0, 0)),    # x in native (N, C, L)
            ],
            out_specs=pl.BlockSpec((nb, C, L), lambda b: (b, 0, 0)),
        ),
        compiler_params=pltpu.CompilerParams(dimension_semantics=("parallel",)),
    )(w_all, x)


def fold_bn(w, gamma, beta, mean, var, eps=1e-5):
    """Fold BatchNorm1d (eval mode) into a preceding bias-free 1x1 conv."""
    scale = gamma / jnp.sqrt(var + eps)
    return w * scale[:, None], beta - mean * scale


def reference(x, wg, wth, bth, wph, bph, wz, bz):
    g = jnp.einsum('oc,ncl->nol', wg, x)
    theta = jnp.einsum('oc,ncl->nol', wth, x) + bth[None, :, None]
    phi = jnp.einsum('oc,ncl->nol', wph, x) + bph[None, :, None]
    f = jnp.einsum('npl,nql->npq', theta, phi)
    f = jax.nn.softmax(f, axis=-1)
    y = jnp.einsum('npq,nql->npl', f, g)
    z = jnp.einsum('cp,npl->ncl', wz, y) + bz[None, :, None]
    return z + x


if __name__ == "__main__":
    N, C_in, L = 2, 16, 128          # batch, inplanes, sequence length
    P = C_in // 2                    # planes = inplanes // 2

    key = jax.random.PRNGKey(0)
    ks = jax.random.split(key, 8)

    x = jax.random.normal(ks[0], (N, C_in, L), jnp.float32)

    # conv1x1 weights (PyTorch shape (out, in, 1), squeezed to (out, in))
    w_g = jax.random.normal(ks[1], (P, C_in), jnp.float32) * 0.1
    w_theta = jax.random.normal(ks[2], (P, C_in), jnp.float32) * 0.1
    w_phi = jax.random.normal(ks[3], (P, C_in), jnp.float32) * 0.1
    w_z = jax.random.normal(ks[4], (C_in, P), jnp.float32) * 0.1

    # BatchNorm parameters / running stats (deterministic, non-trivial)
    def bn_params(k, ch):
        k1, k2, k3, k4 = jax.random.split(k, 4)
        gamma = 1.0 + 0.1 * jax.random.normal(k1, (ch,), jnp.float32)
        beta = 0.1 * jax.random.normal(k2, (ch,), jnp.float32)
        mean = 0.1 * jax.random.normal(k3, (ch,), jnp.float32)
        var = 1.0 + 0.1 * jax.random.uniform(k4, (ch,), jnp.float32)
        return gamma, beta, mean, var

    wth_f, bth_f = fold_bn(w_theta, *bn_params(ks[5], P))
    wph_f, bph_f = fold_bn(w_phi, *bn_params(ks[6], P))
    wz_f, bz_f = fold_bn(w_z, *bn_params(ks[7], C_in))

    # Pack all weights + BN-folded biases ONCE (model init), not per forward call.
    w_all = jax.block_until_ready(
        pack_weights(w_g, wth_f, bth_f, wph_f, bph_f, wz_f, bz_f))

    # batch_blocks=1: one grid step for the whole batch (best for single-TC chips
    # and for small N on v7x; raise only when per-step work beats step overhead).
    out = multimodal_attention(x, w_all, planes=P, batch_blocks=1)
    out = jax.block_until_ready(out)

    ref = reference(x, w_g, wth_f, bth_f, wph_f, bph_f, wz_f, bz_f)
    assert out.shape == (N, C_in, L)
    assert jnp.allclose(out, ref, atol=1e-4, rtol=1e-4), "mismatch vs pure-JAX reference"

    print("KERNEL_OK")
</pallas_src>

<mosaic_0001>
module attributes {stable_mosaic.version = 11 : i64} {
  func.func @mm_attn_kernel(%arg0: i32, %arg1: memref<40x17xf32, #tpu.memory_space<vmem>>, %arg2: memref<2x16x128xf32, #tpu.memory_space<vmem>>, %arg3: memref<2x16x128xf32, #tpu.memory_space<vmem>>) attributes {dimension_semantics = [#tpu.dimension_semantics<parallel>], iteration_bounds = array<i64: 1>, scalar_prefetch = 0 : i64, scratch_operands = 0 : i64, tpu.core_type = #tpu.core_type<tc>, window_params = [{pipeline_mode = #tpu.pipeline_mode<synchronous>, transform_indices = @transform_0, window_bounds = array<i64: 40, 17>}, {transform_indices = @transform_1, window_bounds = array<i64: 2, 16, 128>}, {transform_indices = @transform_2, window_bounds = array<i64: 2, 16, 128>}]} {
    %c0 = arith.constant 0 : index
    %c0_0 = arith.constant 0 : index
    %0 = vector.load %arg1[%c0, %c0_0] : memref<40x17xf32, #tpu.memory_space<vmem>>, vector<24x16xf32>
    %c0_1 = arith.constant 0 : index
    %c16 = arith.constant 16 : index
    %1 = vector.load %arg1[%c0_1, %c16] : memref<40x17xf32, #tpu.memory_space<vmem>>, vector<24x1xf32>
    %c24 = arith.constant 24 : index
    %c0_2 = arith.constant 0 : index
    %2 = vector.load %arg1[%c24, %c0_2] : memref<40x17xf32, #tpu.memory_space<vmem>>, vector<16x8xf32>
    %c24_3 = arith.constant 24 : index
    %c16_4 = arith.constant 16 : index
    %3 = vector.load %arg1[%c24_3, %c16_4] : memref<40x17xf32, #tpu.memory_space<vmem>>, vector<16x1xf32>
    %c0_5 = arith.constant 0 : index
    %c0_6 = arith.constant 0 : index
    %c0_7 = arith.constant 0 : index
    %4 = vector.load %arg2[%c0_5, %c0_6, %c0_7] : memref<2x16x128xf32, #tpu.memory_space<vmem>>, vector<1x16x128xf32>
    %5 = vector.shape_cast %4 : vector<1x16x128xf32> to vector<16x128xf32>
    %cst = arith.constant dense<0.000000e+00> : vector<24x128xf32>
    %6 = tpu.matmul %0, %5, %cst {dimension_numbers = #tpu.dot_dimension_numbers<[1], [0], [0], [1], [0, 0, 1, 1], [], []>} : vector<24x16xf32>, vector<16x128xf32>, vector<24x128xf32> -> vector<24x128xf32>
    %7 = vector.broadcast %1 : vector<24x1xf32> to vector<24x128xf32>
    %8 = arith.addf %6, %7 : vector<24x128xf32>
    %9 = vector.extract_strided_slice %8 {offsets = [0, 0], sizes = [8, 128], strides = [1, 1]} : vector<24x128xf32> to vector<8x128xf32>
    %10 = vector.extract_strided_slice %8 {offsets = [8, 0], sizes = [8, 128], strides = [1, 1]} : vector<24x128xf32> to vector<8x128xf32>
    %11 = vector.extract_strided_slice %8 {offsets = [16, 0], sizes = [8, 128], strides = [1, 1]} : vector<24x128xf32> to vector<8x128xf32>
    %cst_8 = arith.constant dense<0.000000e+00> : vector<8x8xf32>
    %12 = tpu.matmul %10, %11, %cst_8 {dimension_numbers = #tpu.dot_dimension_numbers<[1], [1], [0], [0], [0, 0, 1, 0], [], []>} : vector<8x128xf32>, vector<8x128xf32>, vector<8x8xf32> -> vector<8x8xf32>
    %cst_9 = arith.constant dense<0xFF800000> : vector<8xf32>
    %13 = vector.multi_reduction <maximumf>, %12, %cst_9 [1] : vector<8x8xf32> to vector<8xf32>
    %14 = vector.shape_cast %13 : vector<8xf32> to vector<8x1xf32>
    %15 = vector.broadcast %14 : vector<8x1xf32> to vector<8x8xf32>
    %16 = arith.subf %12, %15 : vector<8x8xf32>
    %17 = math.exp %16 : vector<8x8xf32>
    %cst_10 = arith.constant dense<0.000000e+00> : vector<8xf32>
    %18 = vector.multi_reduction <add>, %17, %cst_10 [1] : vector<8x8xf32> to vector<8xf32>
    %19 = vector.shape_cast %18 : vector<8xf32> to vector<8x1xf32>
    %20 = tpu.reciprocal %19 : vector<8x1xf32> -> vector<8x1xf32>
    %21 = vector.broadcast %20 : vector<8x1xf32> to vector<8x8xf32>
    %22 = arith.mulf %17, %21 : vector<8x8xf32>
    %cst_11 = arith.constant dense<0.000000e+00> : vector<8x128xf32>
    %23 = tpu.matmul %22, %9, %cst_11 {dimension_numbers = #tpu.dot_dimension_numbers<[1], [0], [0], [1], [0, 0, 1, 1], [], []>} : vector<8x8xf32>, vector<8x128xf32>, vector<8x128xf32> -> vector<8x128xf32>
    %cst_12 = arith.constant dense<0.000000e+00> : vector<16x128xf32>
    %24 = tpu.matmul %2, %23, %cst_12 {dimension_numbers = #tpu.dot_dimension_numbers<[1], [0], [0], [1], [0, 0, 1, 1], [], []>} : vector<16x8xf32>, vector<8x128xf32>, vector<16x128xf32> -> vector<16x128xf32>
    %25 = vector.broadcast %3 : vector<16x1xf32> to vector<16x128xf32>
    %26 = arith.addf %24, %25 : vector<16x128xf32>
    %27 = arith.addf %26, %5 : vector<16x128xf32>
    %c0_13 = arith.constant 0 : index
    %c0_14 = arith.constant 0 : index
    %c0_15 = arith.constant 0 : index
    %28 = vector.load %arg3[%c0_13, %c0_14, %c0_15] : memref<2x16x128xf32, #tpu.memory_space<vmem>>, vector<1x16x128xf32>
    %29 = vector.shape_cast %28 : vector<1x16x128xf32> to vector<16x128xf32>
    %30 = vector.shape_cast %27 : vector<16x128xf32> to vector<1x16x128xf32>
    tpu.vector_store %arg3[%c0_13, %c0_14, %c0_15], %30 {strides = array<i32>} : memref<2x16x128xf32, #tpu.memory_space<vmem>>, vector<1x16x128xf32>,
    %c1 = arith.constant 1 : index
    %c0_16 = arith.constant 0 : index
    %c0_17 = arith.constant 0 : index
    %31 = vector.load %arg2[%c1, %c0_16, %c0_17] : memref<2x16x128xf32, #tpu.memory_space<vmem>>, vector<1x16x128xf32>
    %32 = vector.shape_cast %31 : vector<1x16x128xf32> to vector<16x128xf32>
    %cst_18 = arith.constant dense<0.000000e+00> : vector<24x128xf32>
    %33 = tpu.matmul %0, %32, %cst_18 {dimension_numbers = #tpu.dot_dimension_numbers<[1], [0], [0], [1], [0, 0, 1, 1], [], []>} : vector<24x16xf32>, vector<16x128xf32>, vector<24x128xf32> -> vector<24x128xf32>
    %34 = vector.broadcast %1 : vector<24x1xf32> to vector<24x128xf32>
    %35 = arith.addf %33, %34 : vector<24x128xf32>
    %36 = vector.extract_strided_slice %35 {offsets = [0, 0], sizes = [8, 128], strides = [1, 1]} : vector<24x128xf32> to vector<8x128xf32>
    %37 = vector.extract_strided_slice %35 {offsets = [8, 0], sizes = [8, 128], strides = [1, 1]} : vector<24x128xf32> to vector<8x128xf32>
    %38 = vector.extract_strided_slice %35 {offsets = [16, 0], sizes = [8, 128], strides = [1, 1]} : vector<24x128xf32> to vector<8x128xf32>
    %cst_19 = arith.constant dense<0.000000e+00> : vector<8x8xf32>
    %39 = tpu.matmul %37, %38, %cst_19 {dimension_numbers = #tpu.dot_dimension_numbers<[1], [1], [0], [0], [0, 0, 1, 0], [], []>} : vector<8x128xf32>, vector<8x128xf32>, vector<8x8xf32> -> vector<8x8xf32>
    %cst_20 = arith.constant dense<0xFF800000> : vector<8xf32>
    %40 = vector.multi_reduction <maximumf>, %39, %cst_20 [1] : vector<8x8xf32> to vector<8xf32>
    %41 = vector.shape_cast %40 : vector<8xf32> to vector<8x1xf32>
    %42 = vector.broadcast %41 : vector<8x1xf32> to vector<8x8xf32>
    %43 = arith.subf %39, %42 : vector<8x8xf32>
    %44 = math.exp %43 : vector<8x8xf32>
    %cst_21 = arith.constant dense<0.000000e+00> : vector<8xf32>
    %45 = vector.multi_reduction <add>, %44, %cst_21 [1] : vector<8x8xf32> to vector<8xf32>
    %46 = vector.shape_cast %45 : vector<8xf32> to vector<8x1xf32>
    %47 = tpu.reciprocal %46 : vector<8x1xf32> -> vector<8x1xf32>
    %48 = vector.broadcast %47 : vector<8x1xf32> to vector<8x8xf32>
    %49 = arith.mulf %44, %48 : vector<8x8xf32>
    %cst_22 = arith.constant dense<0.000000e+00> : vector<8x128xf32>
    %50 = tpu.matmul %49, %36, %cst_22 {dimension_numbers = #tpu.dot_dimension_numbers<[1], [0], [0], [1], [0, 0, 1, 1], [], []>} : vector<8x8xf32>, vector<8x128xf32>, vector<8x128xf32> -> vector<8x128xf32>
    %cst_23 = arith.constant dense<0.000000e+00> : vector<16x128xf32>
    %51 = tpu.matmul %2, %50, %cst_23 {dimension_numbers = #tpu.dot_dimension_numbers<[1], [0], [0], [1], [0, 0, 1, 1], [], []>} : vector<16x8xf32>, vector<8x128xf32>, vector<16x128xf32> -> vector<16x128xf32>
    %52 = vector.broadcast %3 : vector<16x1xf32> to vector<16x128xf32>
    %53 = arith.addf %51, %52 : vector<16x128xf32>
    %54 = arith.addf %53, %32 : vector<16x128xf32>
    %c1_24 = arith.constant 1 : index
    %c0_25 = arith.constant 0 : index
    %c0_26 = arith.constant 0 : index
    %55 = vector.load %arg3[%c1_24, %c0_25, %c0_26] : memref<2x16x128xf32, #tpu.memory_space<vmem>>, vector<1x16x128xf32>
    %56 = vector.shape_cast %55 : vector<1x16x128xf32> to vector<16x128xf32>
    %57 = vector.shape_cast %54 : vector<16x128xf32> to vector<1x16x128xf32>
    tpu.vector_store %arg3[%c1_24, %c0_25, %c0_26], %57 {strides = array<i32>} : memref<2x16x128xf32, #tpu.memory_space<vmem>>, vector<1x16x128xf32>,
    return
  }
  func.func @transform_0(%arg0: i32) -> (i32, i32) {
    %c0_i32 = arith.constant 0 : i32
    %c0_i32_0 = arith.constant 0 : i32
    %c0_i32_1 = arith.constant 0 : i32
    return %c0_i32, %c0_i32_0 : i32, i32
  }
  func.func @transform_1(%arg0: i32) -> (i32, i32, i32) {
    %c0_i32 = arith.constant 0 : i32
    %c0_i32_0 = arith.constant 0 : i32
    %c0_i32_1 = arith.constant 0 : i32
    return %arg0, %c0_i32, %c0_i32_0 : i32, i32, i32
  }
  func.func @transform_2(%arg0: i32) -> (i32, i32, i32) {
    %c0_i32 = arith.constant 0 : i32
    %c0_i32_0 = arith.constant 0 : i32
    %c0_i32_1 = arith.constant 0 : i32
    return %arg0, %c0_i32, %c0_i32_0 : i32, i32, i32
  }
}

</mosaic_0001>

<llo_original>
// kernel: tpu_custom_call.1
$region0: #{tpu_custom_call.1}
  #allocation0 [shape = 'u32[]', space=smem, size = 0x4, offset = 0x4, fixed_abs, tag = 'smem constant byte address 0x4 - core index']
  #allocation1 [shape = 'u32[144,128]{1,0:T(1,128)}', space=vmem, size = 0x12000, scoped, tag = 'internal scratch']
  %s0 = inlined_call_operand.vmem [shape: f32[40,17], index: 0, kind: input, shape index: {}]
  %s1 = inlined_call_operand.vmem [shape: f32[2,16,128], index: 1, kind: input, shape index: {}]
  %s2 = inlined_call_operand.hbm [shape: f32[2,16,128], index: 2, kind: output, shape index: {}]
  %s3 = sld [smem:[#allocation0]]
  $region18: #{tpu_custom_call.1} parent=0
    _
  %s5 = ssub.s32 1, %s3
  %s6 = scalar_select 0, %s5, %s3
  $region1: #{tpu_custom_call.1} parent=0
    #allocation2 [shape = 'u8[16384]{0}', space=vmem, size = 0x4000, scoped, tag = 'output window, operand 0, single buffered']
    #allocation3 [shape = 's32[1]{0}', space=sflag, size = 0x4, scoped, tag = 'scoped memory for tpu_custom_call.1']
    %7 = vsyncpa [#allocation3], 0
    // Predicated region
    $region2: #{tpu_custom_call.1} parent=1 // pred_check
      _
    $region3: #{tpu_custom_call.1} parent=1 // pred_check_branch
      %9 = sbr.rel (0) target = $region5
    $region4: #{tpu_custom_call.1} parent=1 // pred_region
      _
    $region5: #{tpu_custom_call.1} parent=1 // pred_fallthru
      _
    // Predicated region
    $region6: #{tpu_custom_call.1} parent=1 // pred_check
      _
    $region7: #{tpu_custom_call.1} parent=1 // pred_check_branch
      %11 = sbr.rel (0) target = $region9
    $region8: #{tpu_custom_call.1} parent=1 // pred_region
      _
    $region9: #{tpu_custom_call.1} parent=1 // pred_fallthru
      _
    %v12 = vld [vmem:[%s0] sm:$0xff]
    %v13 = vld [vmem:[%s0 + $0x8] sm:$0xff]
    %v14 = vld [vmem:[%s0 + $0x10] sm:$0xff]
    %v15 = vld [vmem:[%s0 + $0x18] sm:$0xff]
    %v16 = vld [vmem:[%s0 + $0x20] sm:$0xff]
    %v17 = vld [vmem:[%s1] sm:$0xff]
    %v18 = vld [vmem:[%s1 + $0x8] sm:$0xff]
    %20 = vset.pattern.permute.xlu0 16
    %21 = vperm.xlu0 %20, %v12
    %v22 = vpop.permute.xlu0 %21
    %25 = vset.pattern.permute.xlu0 16
    %26 = vperm.xlu0 %25, %v13
    %v27 = vpop.permute.xlu0 %26
    %30 = vset.pattern.permute.xlu0 16
    %31 = vperm.xlu0 %30, %v14
    %v32 = vpop.permute.xlu0 %31
    %vm34 = vcmask 130048
    %v35 = vsel %vm34, %v12, 0
    %v37 = vsel %vm34, %v13, 0
    %v39 = vsel %vm34, %v14, 0
    %41 = vmatprep.subr.mxu0 0.0
    %42 = vmatpush1.msra.mxu0 %v17
    %43 = vmatprep.subr.mxu0 0.0
    %44 = vmatpush1.msra.mxu0 %v18
    %45 = vmatprep.subr.mxu0 0.0
    %46 = vmatpush1.msra.mxu0 0.0
    %47 = vmatprep.subr.mxu0 0.0
    %48 = vmatpush1.msra.mxu0 0.0
    %49 = vmatprep.subr.mxu0 0.0
    %50 = vmatpush1.msra.mxu0 0.0
    %51 = vmatprep.subr.mxu0 0.0
    %52 = vmatpush1.msra.mxu0 0.0
    %53 = vmatprep.subr.mxu0 0.0
    %54 = vmatpush1.msra.mxu0 0.0
    %55 = vmatprep.subr.mxu0 0.0
    %56 = vmatpush1.msra.mxu0 0.0
    %57 = vmatprep.subr.mxu0 0.0
    %58 = vmatpush1.msra.mxu0 0.0
    %59 = vmatprep.subr.mxu0 0.0
    %60 = vmatpush1.msra.mxu0 0.0
    %61 = vmatprep.subr.mxu0 0.0
    %62 = vmatpush1.msra.mxu0 0.0
    %63 = vmatprep.subr.mxu0 0.0
    %64 = vmatpush1.msra.mxu0 0.0
    %65 = vmatprep.subr.mxu0 0.0
    %66 = vmatpush1.msra.mxu0 0.0
    %67 = vmatprep.subr.mxu0 0.0
    %68 = vmatpush1.msra.mxu0 0.0
    %69 = vmatprep.subr.mxu0 0.0
    %70 = vmatpush1.msra.mxu0 0.0
    %71 = vmatprep.subr.mxu0 0.0
    %72 = vmatpush1.msra.mxu0 0.0
    %73 = vmatprep.subr.mxu0 0.0
    %74 = vmatpush1.msra.mxu0 0.0
    %75 = vmatprep.subr.mxu0 0.0
    %76 = vmatpush1.msra.mxu0 0.0
    %77 = vmatprep.subr.mxu0 0.0
    %78 = vmatpush1.msra.mxu0 0.0
    %79 = vmatprep.subr.mxu0 0.0
    %80 = vmatpush1.msra.mxu0 0.0
    %81 = vmatprep.subr.mxu0 0.0
    %82 = vmatpush1.msra.mxu0 0.0
    %83 = vmatprep.subr.mxu0 0.0
    %84 = vmatpush1.msra.mxu0 0.0
    %85 = vmatprep.subr.mxu0 0.0
    %86 = vmatpush1.msra.mxu0 0.0
    %87 = vmatprep.subr.mxu0 0.0
    %88 = vmatpush1.msra.mxu0 0.0
    %89 = vmatprep.subr.mxu0 0.0
    %90 = vmatpush1.msra.mxu0 0.0
    %91 = vmatprep.subr.mxu0 0.0
    %92 = vmatpush1.msra.mxu0 0.0
    %93 = vmatprep.subr.mxu0 0.0
    %94 = vmatpush1.msra.mxu0 0.0
    %95 = vmatprep.subr.mxu0 0.0
    %96 = vmatpush1.msra.mxu0 0.0
    %97 = vmatprep.subr.mxu0 0.0
    %98 = vmatpush1.msra.mxu0 0.0
    %99 = vmatprep.subr.mxu0 0.0
    %100 = vmatpush1.msra.mxu0 0.0
    %101 = vmatprep.subr.mxu0 0.0
    %102 = vmatpush1.msra.mxu0 0.0
    %103 = vmatprep.subr.mxu0 0.0
    %104 = vmatpush1.msra.mxu0 0.0
    %105 = vmatprep.mubr.f32.mxu0 0.0
    %106 = vmatmul.mubr.f32.gmra.mrb[0].mxu0 %v35
    %v107 = vpop.f32.mrb[0].mxu0
    %v108 = vadd.f32 %v22, %v107
    %v109 = vpop.f32.mrb[0].mxu0
    %110 = vmatprep.mubr.f32.mxu0 0.0
    %111 = vmatmul.mubr.f32.gmra.mrb[0].mxu0 %v37
    %v112 = vpop.f32.mrb[0].mxu0
    %v113 = vadd.f32 %v27, %v112
    %v114 = vpop.f32.mrb[0].mxu0
    %115 = vmatprep.mubr.f32.mxu0 0.0
    %116 = vmatmul.mubr.f32.gmra.mrb[0].mxu0 %v39
    %v117 = vpop.f32.mrb[0].mxu0
    %v118 = vadd.f32 %v32, %v117
    %v119 = vpop.f32.mrb[0].mxu0
    %120 = vdwg.mxu0
    %121 = vmatprep.subr.mxu0 0.0
    %122 = vmatpush1.xpose.msra.mxu0 %v118
    %123 = vmatprep.subr.mxu0 0.0
    %124 = vmatpush1.xpose.msra.mxu0 0.0
    %125 = vmatprep.subr.mxu0 0.0
    %126 = vmatpush1.xpose.msra.mxu0 0.0
    %127 = vmatprep.subr.mxu0 0.0
    %128 = vmatpush1.xpose.msra.mxu0 0.0
    %129 = vmatprep.subr.mxu0 0.0
    %130 = vmatpush1.xpose.msra.mxu0 0.0
    %131 = vmatprep.subr.mxu0 0.0
    %132 = vmatpush1.xpose.msra.mxu0 0.0
    %133 = vmatprep.subr.mxu0 0.0
    %134 = vmatpush1.xpose.msra.mxu0 0.0
    %135 = vmatprep.subr.mxu0 0.0
    %136 = vmatpush1.xpose.msra.mxu0 0.0
    %137 = vmatprep.subr.mxu0 0.0
    %138 = vmatpush1.xpose.msra.mxu0 0.0
    %139 = vmatprep.subr.mxu0 0.0
    %140 = vmatpush1.xpose.msra.mxu0 0.0
    %141 = vmatprep.subr.mxu0 0.0
    %142 = vmatpush1.xpose.msra.mxu0 0.0
    %143 = vmatprep.subr.mxu0 0.0
    %144 = vmatpush1.xpose.msra.mxu0 0.0
    %145 = vmatprep.subr.mxu0 0.0
    %146 = vmatpush1.xpose.msra.mxu0 0.0
    %147 = vmatprep.subr.mxu0 0.0
    %148 = vmatpush1.xpose.msra.mxu0 0.0
    %149 = vmatprep.subr.mxu0 0.0
    %150 = vmatpush1.xpose.msra.mxu0 0.0
    %151 = vmatprep.subr.mxu0 0.0
    %152 = vmatpush1.xpose.msra.mxu0 0.0
    %153 = vmatprep.subr.mxu0 0.0
    %154 = vmatpush1.xpose.msra.mxu0 0.0
    %155 = vmatprep.subr.mxu0 0.0
    %156 = vmatpush1.xpose.msra.mxu0 0.0
    %157 = vmatprep.subr.mxu0 0.0
    %158 = vmatpush1.xpose.msra.mxu0 0.0
    %159 = vmatprep.subr.mxu0 0.0
    %160 = vmatpush1.xpose.msra.mxu0 0.0
    %161 = vmatprep.subr.mxu0 0.0
    %162 = vmatpush1.xpose.msra.mxu0 0.0
    %163 = vmatprep.subr.mxu0 0.0
    %164 = vmatpush1.xpose.msra.mxu0 0.0
    %165 = vmatprep.subr.mxu0 0.0
    %166 = vmatpush1.xpose.msra.mxu0 0.0
    %167 = vmatprep.subr.mxu0 0.0
    %168 = vmatpush1.xpose.msra.mxu0 0.0
    %169 = vmatprep.subr.mxu0 0.0
    %170 = vmatpush1.xpose.msra.mxu0 0.0
    %171 = vmatprep.subr.mxu0 0.0
    %172 = vmatpush1.xpose.msra.mxu0 0.0
    %173 = vmatprep.subr.mxu0 0.0
    %174 = vmatpush1.xpose.msra.mxu0 0.0
    %175 = vmatprep.subr.mxu0 0.0
    %176 = vmatpush1.xpose.msra.mxu0 0.0
    %177 = vmatprep.subr.mxu0 0.0
    %178 = vmatpush1.xpose.msra.mxu0 0.0
    %179 = vmatprep.subr.mxu0 0.0
    %180 = vmatpush1.xpose.msra.mxu0 0.0
    %181 = vmatprep.subr.mxu0 0.0
    %182 = vmatpush1.xpose.msra.mxu0 0.0
    %183 = vmatprep.subr.mxu0 0.0
    %184 = vmatpush1.xpose.msra.mxu0 0.0
    %185 = vmatprep.mubr.f32.mxu0 0.0
    %186 = vmatmul.mubr.f32.gmra.mrb[0].mxu0 %v113
    %v187 = vpop.f32.mrb[0].mxu0
    %v188 = vadd.f32 0.0, %v187
    %v189 = vpop.f32.mrb[0].mxu0
    %190 = vdwg.mxu0
    %vm191 = vcmask 64512
    %v192 = vsel %vm191, %v188, -inf
    %193 = vmax.xlane.f32.xlu0 %v192
    %v194 = vpop.xlane.xlu0 %193
    %v195 = vsub.f32 %v188, %v194
    %v196 = vmul.f32 %v195, 1.442695
    %v197 = vpow.pop %v196
    %v198 = vsel %vm191, %v197, 0.0
    %199 = vadd.xlane.f32.xlu0 %v198
    %v200 = vpop.xlane.xlu0 %199
    %v201 = vrcp.pop %v200
    %v202 = vmul.f32 %v197, %v201
    %v204 = vsel %vm191, %v202, 0
    %206 = vmatprep.subr.mxu0 0.0
    %207 = vmatpush1.msra.mxu0 %v108
    %208 = vmatprep.subr.mxu0 0.0
    %209 = vmatpush1.msra.mxu0 0.0
    %210 = vmatprep.subr.mxu0 0.0
    %211 = vmatpush1.msra.mxu0 0.0
    %212 = vmatprep.subr.mxu0 0.0
    %213 = vmatpush1.msra.mxu0 0.0
    %214 = vmatprep.subr.mxu0 0.0
    %215 = vmatpush1.msra.mxu0 0.0
    %216 = vmatprep.subr.mxu0 0.0
    %217 = vmatpush1.msra.mxu0 0.0
    %218 = vmatprep.subr.mxu0 0.0
    %219 = vmatpush1.msra.mxu0 0.0
    %220 = vmatprep.subr.mxu0 0.0
    %221 = vmatpush1.msra.mxu0 0.0
    %222 = vmatprep.subr.mxu0 0.0
    %223 = vmatpush1.msra.mxu0 0.0
    %224 = vmatprep.subr.mxu0 0.0
    %225 = vmatpush1.msra.mxu0 0.0
    %226 = vmatprep.subr.mxu0 0.0
    %227 = vmatpush1.msra.mxu0 0.0
    %228 = vmatprep.subr.mxu0 0.0
    %229 = vmatpush1.msra.mxu0 0.0
    %230 = vmatprep.subr.mxu0 0.0
    %231 = vmatpush1.msra.mxu0 0.0
    %232 = vmatprep.subr.mxu0 0.0
    %233 = vmatpush1.msra.mxu0 0.0
    %234 = vmatprep.subr.mxu0 0.0
    %235 = vmatpush1.msra.mxu0 0.0
    %236 = vmatprep.subr.mxu0 0.0
    %237 = vmatpush1.msra.mxu0 0.0
    %238 = vmatprep.subr.mxu0 0.0
    %239 = vmatpush1.msra.mxu0 0.0
    %240 = vmatprep.subr.mxu0 0.0
    %241 = vmatpush1.msra.mxu0 0.0
    %242 = vmatprep.subr.mxu0 0.0
    %243 = vmatpush1.msra.mxu0 0.0
    %244 = vmatprep.subr.mxu0 0.0
    %245 = vmatpush1.msra.mxu0 0.0
    %246 = vmatprep.subr.mxu0 0.0
    %247 = vmatpush1.msra.mxu0 0.0
    %248 = vmatprep.subr.mxu0 0.0
    %249 = vmatpush1.msra.mxu0 0.0
    %250 = vmatprep.subr.mxu0 0.0
    %251 = vmatpush1.msra.mxu0 0.0
    %252 = vmatprep.subr.mxu0 0.0
    %253 = vmatpush1.msra.mxu0 0.0
    %254 = vmatprep.subr.mxu0 0.0
    %255 = vmatpush1.msra.mxu0 0.0
    %256 = vmatprep.subr.mxu0 0.0
    %257 = vmatpush1.msra.mxu0 0.0
    %258 = vmatprep.subr.mxu0 0.0
    %259 = vmatpush1.msra.mxu0 0.0
    %260 = vmatprep.subr.mxu0 0.0
    %261 = vmatpush1.msra.mxu0 0.0
    %262 = vmatprep.subr.mxu0 0.0
    %263 = vmatpush1.msra.mxu0 0.0
    %264 = vmatprep.subr.mxu0 0.0
    %265 = vmatpush1.msra.mxu0 0.0
    %266 = vmatprep.subr.mxu0 0.0
    %267 = vmatpush1.msra.mxu0 0.0
    %268 = vmatprep.subr.mxu0 0.0
    %269 = vmatpush1.msra.mxu0 0.0
    %270 = vmatprep.mubr.f32.mxu0 0.0
    %271 = vmatmul.mubr.f32.gmra.mrb[0].mxu0 %v204
    %v272 = vpop.f32.mrb[0].mxu0
    %v273 = vadd.f32 0.0, %v272
    %v274 = vpop.f32.mrb[0].mxu0
    %275 = vdwg.mxu0
    %277 = vset.pattern.permute.xlu0 16
    %278 = vperm.xlu0 %277, %v15
    %v279 = vpop.permute.xlu0 %278
    %282 = vset.pattern.permute.xlu0 16
    %283 = vperm.xlu0 %282, %v16
    %v284 = vpop.permute.xlu0 %283
    %v286 = vsel %vm191, %v15, 0
    %v288 = vsel %vm191, %v16, 0
    %290 = vmatprep.subr.mxu0 0.0
    %291 = vmatpush1.msra.mxu0 %v273
    %292 = vmatprep.subr.mxu0 0.0
    %293 = vmatpush1.msra.mxu0 0.0
    %294 = vmatprep.subr.mxu0 0.0
    %295 = vmatpush1.msra.mxu0 0.0
    %296 = vmatprep.subr.mxu0 0.0
    %297 = vmatpush1.msra.mxu0 0.0
    %298 = vmatprep.subr.mxu0 0.0
    %299 = vmatpush1.msra.mxu0 0.0
    %300 = vmatprep.subr.mxu0 0.0
    %301 = vmatpush1.msra.mxu0 0.0
    %302 = vmatprep.subr.mxu0 0.0
    %303 = vmatpush1.msra.mxu0 0.0
    %304 = vmatprep.subr.mxu0 0.0
    %305 = vmatpush1.msra.mxu0 0.0
    %306 = vmatprep.subr.mxu0 0.0
    %307 = vmatpush1.msra.mxu0 0.0
    %308 = vmatprep.subr.mxu0 0.0
    %309 = vmatpush1.msra.mxu0 0.0
    %310 = vmatprep.subr.mxu0 0.0
    %311 = vmatpush1.msra.mxu0 0.0
    %312 = vmatprep.subr.mxu0 0.0
    %313 = vmatpush1.msra.mxu0 0.0
    %314 = vmatprep.subr.mxu0 0.0
    %315 = vmatpush1.msra.mxu0 0.0
    %316 = vmatprep.subr.mxu0 0.0
    %317 = vmatpush1.msra.mxu0 0.0
    %318 = vmatprep.subr.mxu0 0.0
    %319 = vmatpush1.msra.mxu0 0.0
    %320 = vmatprep.subr.mxu0 0.0
    %321 = vmatpush1.msra.mxu0 0.0
    %322 = vmatprep.subr.mxu0 0.0
    %323 = vmatpush1.msra.mxu0 0.0
    %324 = vmatprep.subr.mxu0 0.0
    %325 = vmatpush1.msra.mxu0 0.0
    %326 = vmatprep.subr.mxu0 0.0
    %327 = vmatpush1.msra.mxu0 0.0
    %328 = vmatprep.subr.mxu0 0.0
    %329 = vmatpush1.msra.mxu0 0.0
    %330 = vmatprep.subr.mxu0 0.0
    %331 = vmatpush1.msra.mxu0 0.0
    %332 = vmatprep.subr.mxu0 0.0
    %333 = vmatpush1.msra.mxu0 0.0
    %334 = vmatprep.subr.mxu0 0.0
    %335 = vmatpush1.msra.mxu0 0.0
    %336 = vmatprep.subr.mxu0 0.0
    %337 = vmatpush1.msra.mxu0 0.0
    %338 = vmatprep.subr.mxu0 0.0
    %339 = vmatpush1.msra.mxu0 0.0
    %340 = vmatprep.subr.mxu0 0.0
    %341 = vmatpush1.msra.mxu0 0.0
    %342 = vmatprep.subr.mxu0 0.0
    %343 = vmatpush1.msra.mxu0 0.0
    %344 = vmatprep.subr.mxu0 0.0
    %345 = vmatpush1.msra.mxu0 0.0
    %346 = vmatprep.subr.mxu0 0.0
    %347 = vmatpush1.msra.mxu0 0.0
    %348 = vmatprep.subr.mxu0 0.0
    %349 = vmatpush1.msra.mxu0 0.0
    %350 = vmatprep.subr.mxu0 0.0
    %351 = vmatpush1.msra.mxu0 0.0
    %352 = vmatprep.subr.mxu0 0.0
    %353 = vmatpush1.msra.mxu0 0.0
    %354 = vmatprep.mubr.f32.mxu0 0.0
    %355 = vmatmul.mubr.f32.gmra.mrb[0].mxu0 %v286
    %v356 = vpop.f32.mrb[0].mxu0
    %v357 = vadd.f32 %v279, %v356
    %v358 = vpop.f32.mrb[0].mxu0
    %359 = vmatprep.mubr.f32.mxu0 0.0
    %360 = vmatmul.mubr.f32.gmra.mrb[0].mxu0 %v288
    %v361 = vpop.f32.mrb[0].mxu0
    %v362 = vadd.f32 %v284, %v361
    %v363 = vpop.f32.mrb[0].mxu0
    %364 = vdwg.mxu0
    %v365 = vadd.f32 %v357, %v17
    %v366 = vadd.f32 %v362, %v18
    %367 = vst [vmem:[#allocation2] sm:$0xff] %v365
    %368 = vst [vmem:[#allocation2 + $0x8] sm:$0xff] %v366
    %s369 = scalar_lea.vmem %s1, 16
    %v370 = vld [vmem:[%s369] sm:$0xff]
    %v371 = vld [vmem:[%s369 + $0x8] sm:$0xff]
    %372 = vmatprep.subr.mxu0 0.0
    %373 = vmatpush1.msra.mxu0 %v370
    %374 = vmatprep.subr.mxu0 0.0
    %375 = vmatpush1.msra.mxu0 %v371
    %376 = vmatprep.subr.mxu0 0.0
    %377 = vmatpush1.msra.mxu0 0.0
    %378 = vmatprep.subr.mxu0 0.0
    %379 = vmatpush1.msra.mxu0 0.0
    %380 = vmatprep.subr.mxu0 0.0
    %381 = vmatpush1.msra.mxu0 0.0
    %382 = vmatprep.subr.mxu0 0.0
    %383 = vmatpush1.msra.mxu0 0.0
    %384 = vmatprep.subr.mxu0 0.0
    %385 = vmatpush1.msra.mxu0 0.0
    %386 = vmatprep.subr.mxu0 0.0
    %387 = vmatpush1.msra.mxu0 0.0
    %388 = vmatprep.subr.mxu0 0.0
    %389 = vmatpush1.msra.mxu0 0.0
    %390 = vmatprep.subr.mxu0 0.0
    %391 = vmatpush1.msra.mxu0 0.0
    %392 = vmatprep.subr.mxu0 0.0
    %393 = vmatpush1.msra.mxu0 0.0
    %394 = vmatprep.subr.mxu0 0.0
    %395 = vmatpush1.msra.mxu0 0.0
    %396 = vmatprep.subr.mxu0 0.0
    %397 = vmatpush1.msra.mxu0 0.0
    %398 = vmatprep.subr.mxu0 0.0
    %399 = vmatpush1.msra.mxu0 0.0
    %400 = vmatprep.subr.mxu0 0.0
    %401 = vmatpush1.msra.mxu0 0.0
    %402 = vmatprep.subr.mxu0 0.0
    %403 = vmatpush1.msra.mxu0 0.0
    %404 = vmatprep.subr.mxu0 0.0
    %405 = vmatpush1.msra.mxu0 0.0
    %406 = vmatprep.subr.mxu0 0.0
    %407 = vmatpush1.msra.mxu0 0.0
    %408 = vmatprep.subr.mxu0 0.0
    %409 = vmatpush1.msra.mxu0 0.0
    %410 = vmatprep.subr.mxu0 0.0
    %411 = vmatpush1.msra.mxu0 0.0
    %412 = vmatprep.subr.mxu0 0.0
    %413 = vmatpush1.msra.mxu0 0.0
    %414 = vmatprep.subr.mxu0 0.0
    %415 = vmatpush1.msra.mxu0 0.0
    %416 = vmatprep.subr.mxu0 0.0
    %417 = vmatpush1.msra.mxu0 0.0
    %418 = vmatprep.subr.mxu0 0.0
    %419 = vmatpush1.msra.mxu0 0.0
    %420 = vmatprep.subr.mxu0 0.0
    %421 = vmatpush1.msra.mxu0 0.0
    %422 = vmatprep.subr.mxu0 0.0
    %423 = vmatpush1.msra.mxu0 0.0
    %424 = vmatprep.subr.mxu0 0.0
    %425 = vmatpush1.msra.mxu0 0.0
    %426 = vmatprep.subr.mxu0 0.0
    %427 = vmatpush1.msra.mxu0 0.0
    %428 = vmatprep.subr.mxu0 0.0
    %429 = vmatpush1.msra.mxu0 0.0
    %430 = vmatprep.subr.mxu0 0.0
    %431 = vmatpush1.msra.mxu0 0.0
    %432 = vmatprep.subr.mxu0 0.0
    %433 = vmatpush1.msra.mxu0 0.0
    %434 = vmatprep.subr.mxu0 0.0
    %435 = vmatpush1.msra.mxu0 0.0
    %436 = vmatprep.mubr.f32.mxu0 0.0
    %437 = vmatmul.mubr.f32.gmra.mrb[0].mxu0 %v35
    %v438 = vpop.f32.mrb[0].mxu0
    %v439 = vadd.f32 %v22, %v438
    %v440 = vpop.f32.mrb[0].mxu0
    %441 = vmatprep.mubr.f32.mxu0 0.0
    %442 = vmatmul.mubr.f32.gmra.mrb[0].mxu0 %v37
    %v443 = vpop.f32.mrb[0].mxu0
    %v444 = vadd.f32 %v27, %v443
    %v445 = vpop.f32.mrb[0].mxu0
    %446 = vmatprep.mubr.f32.mxu0 0.0
    %447 = vmatmul.mubr.f32.gmra.mrb[0].mxu0 %v39
    %v448 = vpop.f32.mrb[0].mxu0
    %v449 = vadd.f32 %v32, %v448
    %v450 = vpop.f32.mrb[0].mxu0
    %451 = vdwg.mxu0
    %452 = vmatprep.subr.mxu0 0.0
    %453 = vmatpush1.xpose.msra.mxu0 %v449
    %454 = vmatprep.subr.mxu0 0.0
    %455 = vmatpush1.xpose.msra.mxu0 0.0
    %456 = vmatprep.subr.mxu0 0.0
    %457 = vmatpush1.xpose.msra.mxu0 0.0
    %458 = vmatprep.subr.mxu0 0.0
    %459 = vmatpush1.xpose.msra.mxu0 0.0
    %460 = vmatprep.subr.mxu0 0.0
    %461 = vmatpush1.xpose.msra.mxu0 0.0
    %462 = vmatprep.subr.mxu0 0.0
    %463 = vmatpush1.xpose.msra.mxu0 0.0
    %464 = vmatprep.subr.mxu0 0.0
    %465 = vmatpush1.xpose.msra.mxu0 0.0
    %466 = vmatprep.subr.mxu0 0.0
    %467 = vmatpush1.xpose.msra.mxu0 0.0
    %468 = vmatprep.subr.mxu0 0.0
    %469 = vmatpush1.xpose.msra.mxu0 0.0
    %470 = vmatprep.subr.mxu0 0.0
    %471 = vmatpush1.xpose.msra.mxu0 0.0
    %472 = vmatprep.subr.mxu0 0.0
    %473 = vmatpush1.xpose.msra.mxu0 0.0
    %474 = vmatprep.subr.mxu0 0.0
    %475 = vmatpush1.xpose.msra.mxu0 0.0
    %476 = vmatprep.subr.mxu0 0.0
    %477 = vmatpush1.xpose.msra.mxu0 0.0
    %478 = vmatprep.subr.mxu0 0.0
    %479 = vmatpush1.xpose.msra.mxu0 0.0
    %480 = vmatprep.subr.mxu0 0.0
    %481 = vmatpush1.xpose.msra.mxu0 0.0
    %482 = vmatprep.subr.mxu0 0.0
    %483 = vmatpush1.xpose.msra.mxu0 0.0
    %484 = vmatprep.subr.mxu0 0.0
    %485 = vmatpush1.xpose.msra.mxu0 0.0
    %486 = vmatprep.subr.mxu0 0.0
    %487 = vmatpush1.xpose.msra.mxu0 0.0
    %488 = vmatprep.subr.mxu0 0.0
    %489 = vmatpush1.xpose.msra.mxu0 0.0
    %490 = vmatprep.subr.mxu0 0.0
    %491 = vmatpush1.xpose.msra.mxu0 0.0
    %492 = vmatprep.subr.mxu0 0.0
    %493 = vmatpush1.xpose.msra.mxu0 0.0
    %494 = vmatprep.subr.mxu0 0.0
    %495 = vmatpush1.xpose.msra.mxu0 0.0
    %496 = vmatprep.subr.mxu0 0.0
    %497 = vmatpush1.xpose.msra.mxu0 0.0
    %498 = vmatprep.subr.mxu0 0.0
    %499 = vmatpush1.xpose.msra.mxu0 0.0
    %500 = vmatprep.subr.mxu0 0.0
    %501 = vmatpush1.xpose.msra.mxu0 0.0
    %502 = vmatprep.subr.mxu0 0.0
    %503 = vmatpush1.xpose.msra.mxu0 0.0
    %504 = vmatprep.subr.mxu0 0.0
    %505 = vmatpush1.xpose.msra.mxu0 0.0
    %506 = vmatprep.subr.mxu0 0.0
    %507 = vmatpush1.xpose.msra.mxu0 0.0
    %508 = vmatprep.subr.mxu0 0.0
    %509 = vmatpush1.xpose.msra.mxu0 0.0
    %510 = vmatprep.subr.mxu0 0.0
    %511 = vmatpush1.xpose.msra.mxu0 0.0
    %512 = vmatprep.subr.mxu0 0.0
    %513 = vmatpush1.xpose.msra.mxu0 0.0
    %514 = vmatprep.subr.mxu0 0.0
    %515 = vmatpush1.xpose.msra.mxu0 0.0
    %516 = vmatprep.mubr.f32.mxu0 0.0
    %517 = vmatmul.mubr.f32.gmra.mrb[0].mxu0 %v444
    %v518 = vpop.f32.mrb[0].mxu0
    %v519 = vadd.f32 0.0, %v518
    %v520 = vpop.f32.mrb[0].mxu0
    %521 = vdwg.mxu0
    %v522 = vsel %vm191, %v519, -inf
    %523 = vmax.xlane.f32.xlu0 %v522
    %v524 = vpop.xlane.xlu0 %523
    %v525 = vsub.f32 %v519, %v524
    %v526 = vmul.f32 %v525, 1.442695
    %v527 = vpow.pop %v526
    %v528 = vsel %vm191, %v527, 0.0
    %529 = vadd.xlane.f32.xlu0 %v528
    %v530 = vpop.xlane.xlu0 %529
    %v531 = vrcp.pop %v530
    %v532 = vmul.f32 %v527, %v531
    %v534 = vsel %vm191, %v532, 0
    %536 = vmatprep.subr.mxu0 0.0
    %537 = vmatpush1.msra.mxu0 %v439
    %538 = vmatprep.subr.mxu0 0.0
    %539 = vmatpush1.msra.mxu0 0.0
    %540 = vmatprep.subr.mxu0 0.0
    %541 = vmatpush1.msra.mxu0 0.0
    %542 = vmatprep.subr.mxu0 0.0
    %543 = vmatpush1.msra.mxu0 0.0
    %544 = vmatprep.subr.mxu0 0.0
    %545 = vmatpush1.msra.mxu0 0.0
    %546 = vmatprep.subr.mxu0 0.0
    %547 = vmatpush1.msra.mxu0 0.0
    %548 = vmatprep.subr.mxu0 0.0
    %549 = vmatpush1.msra.mxu0 0.0
    %550 = vmatprep.subr.mxu0 0.0
    %551 = vmatpush1.msra.mxu0 0.0
    %552 = vmatprep.subr.mxu0 0.0
    %553 = vmatpush1.msra.mxu0 0.0
    %554 = vmatprep.subr.mxu0 0.0
    %555 = vmatpush1.msra.mxu0 0.0
    %556 = vmatprep.subr.mxu0 0.0
    %557 = vmatpush1.msra.mxu0 0.0
    %558 = vmatprep.subr.mxu0 0.0
    %559 = vmatpush1.msra.mxu0 0.0
    %560 = vmatprep.subr.mxu0 0.0
    %561 = vmatpush1.msra.mxu0 0.0
    %562 = vmatprep.subr.mxu0 0.0
    %563 = vmatpush1.msra.mxu0 0.0
    %564 = vmatprep.subr.mxu0 0.0
    %565 = vmatpush1.msra.mxu0 0.0
    %566 = vmatprep.subr.mxu0 0.0
    %567 = vmatpush1.msra.mxu0 0.0
    %568 = vmatprep.subr.mxu0 0.0
    %569 = vmatpush1.msra.mxu0 0.0
    %570 = vmatprep.subr.mxu0 0.0
    %571 = vmatpush1.msra.mxu0 0.0
    %572 = vmatprep.subr.mxu0 0.0
    %573 = vmatpush1.msra.mxu0 0.0
    %574 = vmatprep.subr.mxu0 0.0
    %575 = vmatpush1.msra.mxu0 0.0
    %576 = vmatprep.subr.mxu0 0.0
    %577 = vmatpush1.msra.mxu0 0.0
    %578 = vmatprep.subr.mxu0 0.0
    %579 = vmatpush1.msra.mxu0 0.0
    %580 = vmatprep.subr.mxu0 0.0
    %581 = vmatpush1.msra.mxu0 0.0
    %582 = vmatprep.subr.mxu0 0.0
    %583 = vmatpush1.msra.mxu0 0.0
    %584 = vmatprep.subr.mxu0 0.0
    %585 = vmatpush1.msra.mxu0 0.0
    %586 = vmatprep.subr.mxu0 0.0
    %587 = vmatpush1.msra.mxu0 0.0
    %588 = vmatprep.subr.mxu0 0.0
    %589 = vmatpush1.msra.mxu0 0.0
    %590 = vmatprep.subr.mxu0 0.0
    %591 = vmatpush1.msra.mxu0 0.0
    %592 = vmatprep.subr.mxu0 0.0
    %593 = vmatpush1.msra.mxu0 0.0
    %594 = vmatprep.subr.mxu0 0.0
    %595 = vmatpush1.msra.mxu0 0.0
    %596 = vmatprep.subr.mxu0 0.0
    %597 = vmatpush1.msra.mxu0 0.0
    %598 = vmatprep.subr.mxu0 0.0
    %599 = vmatpush1.msra.mxu0 0.0
    %600 = vmatprep.mubr.f32.mxu0 0.0
    %601 = vmatmul.mubr.f32.gmra.mrb[0].mxu0 %v534
    %v602 = vpop.f32.mrb[0].mxu0
    %v603 = vadd.f32 0.0, %v602
    %v604 = vpop.f32.mrb[0].mxu0
    %605 = vdwg.mxu0
    %606 = vmatprep.subr.mxu0 0.0
    %607 = vmatpush1.msra.mxu0 %v603
    %608 = vmatprep.subr.mxu0 0.0
    %609 = vmatpush1.msra.mxu0 0.0
    %610 = vmatprep.subr.mxu0 0.0
    %611 = vmatpush1.msra.mxu0 0.0
    %612 = vmatprep.subr.mxu0 0.0
    %613 = vmatpush1.msra.mxu0 0.0
    %614 = vmatprep.subr.mxu0 0.0
    %615 = vmatpush1.msra.mxu0 0.0
    %616 = vmatprep.subr.mxu0 0.0
    %617 = vmatpush1.msra.mxu0 0.0
    %618 = vmatprep.subr.mxu0 0.0
    %619 = vmatpush1.msra.mxu0 0.0
    %620 = vmatprep.subr.mxu0 0.0
    %621 = vmatpush1.msra.mxu0 0.0
    %622 = vmatprep.subr.mxu0 0.0
    %623 = vmatpush1.msra.mxu0 0.0
    %624 = vmatprep.subr.mxu0 0.0
    %625 = vmatpush1.msra.mxu0 0.0
    %626 = vmatprep.subr.mxu0 0.0
    %627 = vmatpush1.msra.mxu0 0.0
    %628 = vmatprep.subr.mxu0 0.0
    %629 = vmatpush1.msra.mxu0 0.0
    %630 = vmatprep.subr.mxu0 0.0
    %631 = vmatpush1.msra.mxu0 0.0
    %632 = vmatprep.subr.mxu0 0.0
    %633 = vmatpush1.msra.mxu0 0.0
    %634 = vmatprep.subr.mxu0 0.0
    %635 = vmatpush1.msra.mxu0 0.0
    %636 = vmatprep.subr.mxu0 0.0
    %637 = vmatpush1.msra.mxu0 0.0
    %638 = vmatprep.subr.mxu0 0.0
    %639 = vmatpush1.msra.mxu0 0.0
    %640 = vmatprep.subr.mxu0 0.0
    %641 = vmatpush1.msra.mxu0 0.0
    %642 = vmatprep.subr.mxu0 0.0
    %643 = vmatpush1.msra.mxu0 0.0
    %644 = vmatprep.subr.mxu0 0.0
    %645 = vmatpush1.msra.mxu0 0.0
    %646 = vmatprep.subr.mxu0 0.0
    %647 = vmatpush1.msra.mxu0 0.0
    %648 = vmatprep.subr.mxu0 0.0
    %649 = vmatpush1.msra.mxu0 0.0
    %650 = vmatprep.subr.mxu0 0.0
    %651 = vmatpush1.msra.mxu0 0.0
    %652 = vmatprep.subr.mxu0 0.0
    %653 = vmatpush1.msra.mxu0 0.0
    %654 = vmatprep.subr.mxu0 0.0
    %655 = vmatpush1.msra.mxu0 0.0
    %656 = vmatprep.subr.mxu0 0.0
    %657 = vmatpush1.msra.mxu0 0.0
    %658 = vmatprep.subr.mxu0 0.0
    %659 = vmatpush1.msra.mxu0 0.0
    %660 = vmatprep.subr.mxu0 0.0
    %661 = vmatpush1.msra.mxu0 0.0
    %662 = vmatprep.subr.mxu0 0.0
    %663 = vmatpush1.msra.mxu0 0.0
    %664 = vmatprep.subr.mxu0 0.0
    %665 = vmatpush1.msra.mxu0 0.0
    %666 = vmatprep.subr.mxu0 0.0
    %667 = vmatpush1.msra.mxu0 0.0
    %668 = vmatprep.subr.mxu0 0.0
    %669 = vmatpush1.msra.mxu0 0.0
    %670 = vmatprep.mubr.f32.mxu0 0.0
    %671 = vmatmul.mubr.f32.gmra.mrb[0].mxu0 %v286
    %v672 = vpop.f32.mrb[0].mxu0
    %v673 = vadd.f32 %v279, %v672
    %v674 = vpop.f32.mrb[0].mxu0
    %675 = vmatprep.mubr.f32.mxu0 0.0
    %676 = vmatmul.mubr.f32.gmra.mrb[0].mxu0 %v288
    %v677 = vpop.f32.mrb[0].mxu0
    %v678 = vadd.f32 %v284, %v677
    %v679 = vpop.f32.mrb[0].mxu0
    %680 = vdwg.mxu0
    %v681 = vadd.f32 %v673, %v370
    %v682 = vadd.f32 %v678, %v371
    %s683 = scalar_lea.vmem [#allocation2], 16
    %684 = vst [vmem:[%s683] sm:$0xff] %v681
    %685 = vst [vmem:[%s683 + $0x8] sm:$0xff] %v682
    // Predicated region
    $region10: #{tpu_custom_call.1} parent=1 // pred_check
      _
    $region11: #{tpu_custom_call.1} parent=1 // pred_check_branch
      %687 = sbr.rel (0) target = $region13
    $region12: #{tpu_custom_call.1} parent=1 // pred_region
      %s689 = ssub.s32 512, 512
      %690 = vsyncadd [#allocation3], %s689
      %s691 = sshll.u32 [#allocation2], 4
      %s692 = int_to_ptr.vmem [resolvable:$true] %s691
      %697 = dma.vmem_to_hbm [thread:$0]  %s692, 512, %s2, [#allocation3], 128, 128, 8
    $region13: #{tpu_custom_call.1} parent=1 // pred_fallthru
      _
    // Predicated region
    $region14: #{tpu_custom_call.1} parent=1 // pred_check
      _
    $region15: #{tpu_custom_call.1} parent=1 // pred_check_branch
      %699 = sbr.rel (0) target = $region17
    $region16: #{tpu_custom_call.1} parent=1 // pred_region
      %700 = dma.done [#allocation3], 512
    $region17: #{tpu_custom_call.1} parent=1 // pred_fallthru
      _
    %701 = vsyncpa [#allocation3], 1

</llo_original>
